<compile_context>
chip_gen: v7x
topology: tpu7x:2x2x1
jax: 0.10.0
libtpu: 0.0.40
codegen_flags: <defaults>
</compile_context>

<pallas_src>
import functools

import jax
import jax.numpy as jnp
from jax.experimental import pallas as pl
from jax.experimental.pallas import tpu as pltpu

_F32 = 4  # bytes per float32


# -----------------------------------------------------------------------------
# Hardware-aware budgets
# -----------------------------------------------------------------------------
def _vmem_params():
    """Generation-aware VMEM budgets.

    v7x-class chips: 64 MiB VMEM / TensorCore and 2 TensorCores per chip
    (keep >= 2 feature-tile grid steps so both cores get work).
    v5e/v6e-class: 128 MiB VMEM, single TensorCore (use big tiles, never split
    just for "parallelism").
    """
    try:
        cap = int(pltpu.get_tpu_info().vmem_capacity_bytes)
    except Exception:
        cap = 64 << 20          # unknown target: assume the smaller (v7x) VMEM
    if cap <= (64 << 20):       # v7x-class
        return {"data_budget": 36 << 20, "vmem_limit": 56 << 20, "two_tc": True}
    # v5e / v6e class (128 MiB physical; default scoped limit is only 16-32 MiB,
    # so the explicit vmem_limit_bytes below matters most on v5e).
    return {"data_budget": 88 << 20, "vmem_limit": 100 << 20, "two_tc": False}


# -----------------------------------------------------------------------------
# Tile selection
# -----------------------------------------------------------------------------
def _pick_block_f(N, F, data_budget, two_tc):
    """Feature tile for the single-pass training kernel (whole batch resident).

    Per-step footprint model: double-buffered x input (2x) + double-buffered
    output (2x) + ~1x headroom for in-kernel elementwise/reduction temporaries
    => 5 * N * bf * 4 bytes (+ small per-feature tiles).  Returns 0 if even a
    128-lane tile does not fit (caller falls back to the two-pass path).
    """
    def fits(bf):
        return 5 * N * bf * _F32 + 32 * bf * _F32 <= data_budget

    if F % 128 != 0:
        return F if fits(F) else 0
    nf = F // 128
    cands = [d * 128 for d in range(1, nf + 1) if nf % d == 0 and fits(d * 128)]
    if not cands:
        return 0
    if two_tc and nf >= 2:
        # 2-TC chips: keep >= 2 grid steps, preferring an even step count so
        # neither TensorCore does an extra (imbalanced) step.
        even = [bf for bf in cands if (F // bf) % 2 == 0]
        if even:
            return max(even)
        multi = [bf for bf in cands if F // bf >= 2]
        if multi:
            return max(multi)
    return max(cands)


def _largest_divisor_multiple(n, base, limit):
    """Largest divisor of n that is a multiple of `base` and <= limit (0 if none)."""
    best = 0
    d = base
    cap = min(n, limit)
    while d <= cap:
        if n % d == 0:
            best = d
        d += base
    return best


def _pick_2d_blocks(N, F, data_budget, block_n=None, block_f=None):
    """Tiles for the batch-tiled 2-D grids (eval mode, and both passes of the
    large-N training fallback).  Per-step footprint: in + out, double-buffered
    = 4 * bn * bf * 4 bytes."""
    if block_f is None:
        if F % 128 == 0:
            nf = F // 128
            block_f = 128
            for d in range(1, nf + 1):
                if nf % d == 0 and 4 * 8 * (d * 128) * _F32 <= data_budget:
                    block_f = d * 128
        else:
            block_f = F            # full feature row: only lane-legal option
    if block_n is None:
        max_bn = max(8, data_budget // (4 * block_f * _F32))
        if N % 8 == 0:
            block_n = _largest_divisor_multiple(N, 8, max_bn) or 8
        else:
            block_n = N
    return block_n, block_f


def _check_blocks(N, F, bn, bf):
    assert F % bf == 0 and (bf % 128 == 0 or bf == F), (bf, F)
    assert N % bn == 0 and (bn % 8 == 0 or bn == N), (bn, N)


# -----------------------------------------------------------------------------
# Kernels
# -----------------------------------------------------------------------------
def _bn_train_kernel(x_ref, params_ref, stats_ref, out_ref, new_stats_ref,
                     *, epsilon, momentum):
    """Single-pass training kernel: whole batch for one feature tile per step.

    x_ref: (N, bf).  params_ref: (2, bf) = [gamma; beta].
    stats_ref / new_stats_ref: (2, bf) = [running_mean; running_var].
    """
    x = x_ref[...].astype(jnp.float32)

    mean = jnp.mean(x, axis=0, keepdims=True)                   # (1, bf)
    mean_sq = jnp.mean(x * x, axis=0, keepdims=True)            # (1, bf)
    var = jnp.maximum(mean_sq - mean * mean, 0.0)               # biased variance

    gamma = params_ref[0:1, :].astype(jnp.float32)
    beta = params_ref[1:2, :].astype(jnp.float32)
    inv_std = jax.lax.rsqrt(var + epsilon)                      # EUP rsqrt
    scale = gamma * inv_std
    shift = beta - mean * scale
    # one broadcasted mul+add per (8,128) vreg, straight from the resident tile
    out_ref[...] = (x * scale + shift).astype(out_ref.dtype)

    # running stats (module convention): r = m * r + (1 - m) * batch_stat
    rm = stats_ref[0:1, :].astype(jnp.float32)
    rv = stats_ref[1:2, :].astype(jnp.float32)
    new_stats_ref[0:1, :] = (momentum * rm + (1.0 - momentum) * mean).astype(new_stats_ref.dtype)
    new_stats_ref[1:2, :] = (momentum * rv + (1.0 - momentum) * var).astype(new_stats_ref.dtype)


def _bn_stats_kernel(x_ref, stats_ref, new_stats_ref, bstats_ref, acc_ref,
                     *, momentum, inv_n):
    """Two-pass fallback, pass 1: accumulate sum / sum-of-squares over batch tiles.

    grid = (F // bf, N // bn); axis 0 'parallel' over features, axis 1 the
    'arbitrary' batch reduction (last in the grid).
    """
    ni = pl.program_id(1)

    @pl.when(ni == 0)
    def _init():
        acc_ref[...] = jnp.zeros_like(acc_ref)

    x = x_ref[...].astype(jnp.float32)                           # (bn, bf)
    acc_ref[0:1, :] += jnp.sum(x, axis=0, keepdims=True)
    acc_ref[1:2, :] += jnp.sum(x * x, axis=0, keepdims=True)

    @pl.when(ni == pl.num_programs(1) - 1)
    def _finalize():
        mean = acc_ref[0:1, :] * inv_n
        var = jnp.maximum(acc_ref[1:2, :] * inv_n - mean * mean, 0.0)
        bstats_ref[0:1, :] = mean.astype(bstats_ref.dtype)
        bstats_ref[1:2, :] = var.astype(bstats_ref.dtype)
        rm = stats_ref[0:1, :].astype(jnp.float32)
        rv = stats_ref[1:2, :].astype(jnp.float32)
        new_stats_ref[0:1, :] = (momentum * rm + (1.0 - momentum) * mean).astype(new_stats_ref.dtype)
        new_stats_ref[1:2, :] = (momentum * rv + (1.0 - momentum) * var).astype(new_stats_ref.dtype)


def _bn_normalize_kernel(x_ref, params_ref, stats_ref, out_ref, *, epsilon):
    """out = gamma * (x - mean) / sqrt(var + eps) + beta for one (bn, bf) tile.

    Used for eval mode (running stats) and pass 2 of the fallback (batch stats).
    """
    gamma = params_ref[0:1, :].astype(jnp.float32)
    beta = params_ref[1:2, :].astype(jnp.float32)
    mean = stats_ref[0:1, :].astype(jnp.float32)
    var = stats_ref[1:2, :].astype(jnp.float32)
    scale = gamma * jax.lax.rsqrt(var + epsilon)
    shift = beta - mean * scale
    out_ref[...] = (x_ref[...].astype(jnp.float32) * scale + shift).astype(out_ref.dtype)


# -----------------------------------------------------------------------------
# pallas_call builders
# -----------------------------------------------------------------------------
def _normalize_call(x, params2, stats2, *, epsilon, block_n, block_f, vmem_limit):
    N, F = x.shape
    grid = (N // block_n, F // block_f)
    return pl.pallas_call(
        functools.partial(_bn_normalize_kernel, epsilon=epsilon),
        out_shape=jax.ShapeDtypeStruct((N, F), x.dtype),
        grid_spec=pltpu.PrefetchScalarGridSpec(
            num_scalar_prefetch=0,
            grid=grid,
            in_specs=[pl.BlockSpec((block_n, block_f), lambda i, j: (i, j)),
                      pl.BlockSpec((2, block_f), lambda i, j: (0, j)),
                      pl.BlockSpec((2, block_f), lambda i, j: (0, j))],
            out_specs=pl.BlockSpec((block_n, block_f), lambda i, j: (i, j)),
        ),
        compiler_params=pltpu.CompilerParams(
            dimension_semantics=("parallel", "parallel"),
            vmem_limit_bytes=int(vmem_limit),
        ),
    )(x, params2, stats2)


def _batch_stats_call(x, stats2, *, momentum, block_n, block_f, vmem_limit):
    N, F = x.shape
    grid = (F // block_f, N // block_n)
    return pl.pallas_call(
        functools.partial(_bn_stats_kernel, momentum=momentum, inv_n=1.0 / N),
        out_shape=(jax.ShapeDtypeStruct((2, F), jnp.float32),   # new running stats
                   jax.ShapeDtypeStruct((2, F), jnp.float32)),  # batch [mean; var]
        grid_spec=pltpu.PrefetchScalarGridSpec(
            num_scalar_prefetch=0,
            grid=grid,
            in_specs=[pl.BlockSpec((block_n, block_f), lambda j, i: (i, j)),
                      pl.BlockSpec((2, block_f), lambda j, i: (0, j))],
            out_specs=[pl.BlockSpec((2, block_f), lambda j, i: (0, j)),
                       pl.BlockSpec((2, block_f), lambda j, i: (0, j))],
            scratch_shapes=[pltpu.VMEM((2, block_f), jnp.float32)],
        ),
        compiler_params=pltpu.CompilerParams(
            dimension_semantics=("parallel", "arbitrary"),
            vmem_limit_bytes=int(vmem_limit),
        ),
    )(x, stats2)


# -----------------------------------------------------------------------------
# Wrapper
# -----------------------------------------------------------------------------
def batch_norm_forward(x, gamma, beta, running_mean, running_var, *,
                       epsilon=1e-5, momentum=0.9, training=True,
                       block_f=None, block_n=None, force_two_pass=False):
    """BatchNorm forward matching the reference PyTorch module.

    x: (N, F).  gamma/beta/running_mean/running_var: (F,).
      training=True  -> (out, new_running_mean, new_running_var)
      training=False -> (out, running_mean, running_var)   (buffers untouched)
    """
    N, F = x.shape
    hw = _vmem_params()
    vmem_limit = hw["vmem_limit"]

    params2 = jnp.stack([gamma, beta]).astype(jnp.float32)                # (2, F)
    stats2 = jnp.stack([running_mean, running_var]).astype(jnp.float32)   # (2, F)

    if not training:
        # No batch reduction in eval: 2-D grid, both axes parallel.
        bn_, bf_ = _pick_2d_blocks(N, F, hw["data_budget"], block_n, block_f)
        _check_blocks(N, F, bn_, bf_)
        out = _normalize_call(x, params2, stats2, epsilon=epsilon,
                              block_n=bn_, block_f=bf_, vmem_limit=vmem_limit)
        return out, running_mean, running_var

    # ---- training ----
    bf_single = block_f if block_f is not None else \
        _pick_block_f(N, F, hw["data_budget"], hw["two_tc"])

    if bf_single and not force_two_pass:
        # Single-pass path: the whole batch for one feature tile is resident.
        assert F % bf_single == 0 and (bf_single % 128 == 0 or bf_single == F)
        x_spec = pl.BlockSpec((N, bf_single), lambda j: (0, j))
        vec_spec = pl.BlockSpec((2, bf_single), lambda j: (0, j))
        out, new_stats = pl.pallas_call(
            functools.partial(_bn_train_kernel, epsilon=epsilon, momentum=momentum),
            out_shape=(jax.ShapeDtypeStruct((N, F), x.dtype),
                       jax.ShapeDtypeStruct((2, F), jnp.float32)),
            grid_spec=pltpu.PrefetchScalarGridSpec(
                num_scalar_prefetch=0,
                grid=(F // bf_single,),
                in_specs=[x_spec, vec_spec, vec_spec],
                out_specs=[x_spec, vec_spec],
            ),
            compiler_params=pltpu.CompilerParams(
                dimension_semantics=("parallel",),
                vmem_limit_bytes=int(vmem_limit),
            ),
        )(x, params2, stats2)
        return out, new_stats[0], new_stats[1]

    # Two-pass fallback for batches too large to keep a whole (N, 128) column
    # in VMEM: pass 1 accumulates sum / sum-of-squares over batch tiles, pass 2
    # normalizes.  Costs one extra read of x but stays memory-bound.
    bn_, bf_ = _pick_2d_blocks(N, F, hw["data_budget"], block_n, block_f)
    _check_blocks(N, F, bn_, bf_)
    new_stats, bstats = _batch_stats_call(x, stats2, momentum=momentum,
                                          block_n=bn_, block_f=bf_,
                                          vmem_limit=vmem_limit)
    out = _normalize_call(x, params2, bstats, epsilon=epsilon,
                          block_n=bn_, block_f=bf_, vmem_limit=vmem_limit)
    return out, new_stats[0], new_stats[1]


# -----------------------------------------------------------------------------
# Reference (mirrors the PyTorch module exactly)
# -----------------------------------------------------------------------------
def _reference_train(x, gamma, beta, running_mean, running_var, epsilon, momentum):
    mean = jnp.mean(x, axis=0)
    var = jnp.mean((x - mean) ** 2, axis=0)          # unbiased=False
    xn = (x - mean) / jnp.sqrt(var + epsilon)
    out = gamma * xn + beta
    new_rm = momentum * running_mean + (1.0 - momentum) * mean
    new_rv = momentum * running_var + (1.0 - momentum) * var
    return out, new_rm, new_rv


def _reference_eval(x, gamma, beta, running_mean, running_var, epsilon):
    xn = (x - running_mean) / jnp.sqrt(running_var + epsilon)
    return gamma * xn + beta


if __name__ == "__main__":
    num_features = 256
    batch = 16
    epsilon = 1e-5
    momentum = 0.9

    key = jax.random.PRNGKey(0)
    kx, krm, krv = jax.random.split(key, 3)
    x = jax.random.normal(kx, (batch, num_features), dtype=jnp.float32)

    # Parameter / buffer init matching the module's __init__.
    gamma = jnp.ones((num_features,), dtype=jnp.float32)
    beta = jnp.zeros((num_features,), dtype=jnp.float32)
    running_mean = jnp.zeros((num_features,), dtype=jnp.float32)
    running_var = jnp.ones((num_features,), dtype=jnp.float32)

    ref_out, ref_rm, ref_rv = _reference_train(
        x, gamma, beta, running_mean, running_var, epsilon, momentum)

    # ---- training-mode forward (single-pass path) ----
    out, new_rm, new_rv = batch_norm_forward(
        x, gamma, beta, running_mean, running_var,
        epsilon=epsilon, momentum=momentum, training=True)
    jax.block_until_ready((out, new_rm, new_rv))
    assert jnp.allclose(out, ref_out, atol=1e-5, rtol=1e-5)
    assert jnp.allclose(new_rm, ref_rm, atol=1e-6, rtol=1e-6)
    assert jnp.allclose(new_rv, ref_rv, atol=1e-6, rtol=1e-6)

    # ---- training-mode forward via the large-N two-pass fallback (forced,
    #      with the batch split into two tiles to exercise the accumulator) ----
    out2, rm2, rv2 = batch_norm_forward(
        x, gamma, beta, running_mean, running_var,
        epsilon=epsilon, momentum=momentum, training=True,
        force_two_pass=True, block_n=8)
    jax.block_until_ready((out2, rm2, rv2))
    assert jnp.allclose(out2, ref_out, atol=1e-5, rtol=1e-5)
    assert jnp.allclose(rm2, ref_rm, atol=1e-6, rtol=1e-6)
    assert jnp.allclose(rv2, ref_rv, atol=1e-6, rtol=1e-6)

    # ---- eval-mode forward (uses slightly non-trivial running stats) ----
    rm_eval = 0.1 * jax.random.normal(krm, (num_features,), dtype=jnp.float32)
    rv_eval = 1.0 + 0.1 * jax.random.uniform(krv, (num_features,), dtype=jnp.float32)
    out_eval, _, _ = batch_norm_forward(
        x, gamma, beta, rm_eval, rv_eval,
        epsilon=epsilon, momentum=momentum, training=False)
    jax.block_until_ready(out_eval)
    ref_eval = _reference_eval(x, gamma, beta, rm_eval, rv_eval, epsilon)
    assert jnp.allclose(out_eval, ref_eval, atol=1e-5, rtol=1e-5)

    print("KERNEL_OK")
</pallas_src>

<mosaic_0001>
module attributes {stable_mosaic.version = 11 : i64} {
  func.func @_bn_train_kernel(%arg0: i32, %arg1: memref<16x128xf32, #tpu.memory_space<vmem>>, %arg2: memref<2x128xf32, #tpu.memory_space<vmem>>, %arg3: memref<2x128xf32, #tpu.memory_space<vmem>>, %arg4: memref<16x128xf32, #tpu.memory_space<vmem>>, %arg5: memref<2x128xf32, #tpu.memory_space<vmem>>) attributes {dimension_semantics = [#tpu.dimension_semantics<parallel>], iteration_bounds = array<i64: 2>, scalar_prefetch = 0 : i64, scratch_operands = 0 : i64, tpu.core_type = #tpu.core_type<tc>, window_params = [{transform_indices = @transform_0, window_bounds = array<i64: 16, 128>}, {transform_indices = @transform_1, window_bounds = array<i64: 2, 128>}, {transform_indices = @transform_2, window_bounds = array<i64: 2, 128>}, {transform_indices = @transform_3, window_bounds = array<i64: 16, 128>}, {transform_indices = @transform_4, window_bounds = array<i64: 2, 128>}]} {
    %c0 = arith.constant 0 : index
    %c0_0 = arith.constant 0 : index
    %0 = vector.load %arg1[%c0, %c0_0] : memref<16x128xf32, #tpu.memory_space<vmem>>, vector<16x128xf32>
    %cst = arith.constant dense<0.000000e+00> : vector<128xf32>
    %1 = vector.multi_reduction <add>, %0, %cst [0] : vector<16x128xf32> to vector<128xf32>
    %2 = vector.shape_cast %1 : vector<128xf32> to vector<1x128xf32>
    %cst_1 = arith.constant 1.600000e+01 : f32
    %3 = vector.broadcast %cst_1 : f32 to vector<1x128xf32>
    %4 = arith.divf %2, %3 : vector<1x128xf32>
    %5 = arith.mulf %0, %0 : vector<16x128xf32>
    %cst_2 = arith.constant dense<0.000000e+00> : vector<128xf32>
    %6 = vector.multi_reduction <add>, %5, %cst_2 [0] : vector<16x128xf32> to vector<128xf32>
    %7 = vector.shape_cast %6 : vector<128xf32> to vector<1x128xf32>
    %cst_3 = arith.constant 1.600000e+01 : f32
    %8 = vector.broadcast %cst_3 : f32 to vector<1x128xf32>
    %9 = arith.divf %7, %8 : vector<1x128xf32>
    %10 = arith.mulf %4, %4 : vector<1x128xf32>
    %11 = arith.subf %9, %10 : vector<1x128xf32>
    %cst_4 = arith.constant 0.000000e+00 : f32
    %12 = vector.broadcast %cst_4 : f32 to vector<1x128xf32>
    %13 = arith.maximumf %11, %12 : vector<1x128xf32>
    %c0_5 = arith.constant 0 : index
    %c0_6 = arith.constant 0 : index
    %14 = vector.load %arg2[%c0_5, %c0_6] : memref<2x128xf32, #tpu.memory_space<vmem>>, vector<1x128xf32>
    %c1 = arith.constant 1 : index
    %c0_7 = arith.constant 0 : index
    %15 = vector.load %arg2[%c1, %c0_7] : memref<2x128xf32, #tpu.memory_space<vmem>>, vector<1x128xf32>
    %cst_8 = arith.constant 9.99999974E-6 : f32
    %16 = vector.broadcast %cst_8 : f32 to vector<1x128xf32>
    %17 = arith.addf %13, %16 : vector<1x128xf32>
    %18 = math.rsqrt %17 : vector<1x128xf32>
    %19 = arith.mulf %14, %18 : vector<1x128xf32>
    %20 = arith.mulf %4, %19 : vector<1x128xf32>
    %21 = arith.subf %15, %20 : vector<1x128xf32>
    %22 = vector.broadcast %19 : vector<1x128xf32> to vector<16x128xf32>
    %23 = arith.mulf %0, %22 : vector<16x128xf32>
    %24 = vector.broadcast %21 : vector<1x128xf32> to vector<16x128xf32>
    %25 = arith.addf %23, %24 : vector<16x128xf32>
    %c0_9 = arith.constant 0 : index
    %c0_10 = arith.constant 0 : index
    %26 = vector.load %arg4[%c0_9, %c0_10] : memref<16x128xf32, #tpu.memory_space<vmem>>, vector<16x128xf32>
    tpu.vector_store %arg4[%c0_9, %c0_10], %25 {strides = array<i32>} : memref<16x128xf32, #tpu.memory_space<vmem>>, vector<16x128xf32>,
    %c0_11 = arith.constant 0 : index
    %c0_12 = arith.constant 0 : index
    %27 = vector.load %arg3[%c0_11, %c0_12] : memref<2x128xf32, #tpu.memory_space<vmem>>, vector<1x128xf32>
    %c1_13 = arith.constant 1 : index
    %c0_14 = arith.constant 0 : index
    %28 = vector.load %arg3[%c1_13, %c0_14] : memref<2x128xf32, #tpu.memory_space<vmem>>, vector<1x128xf32>
    %cst_15 = arith.constant 0.899999976 : f32
    %29 = vector.broadcast %cst_15 : f32 to vector<1x128xf32>
    %30 = arith.mulf %29, %27 : vector<1x128xf32>
    %cst_16 = arith.constant 1.000000e-01 : f32
    %31 = vector.broadcast %cst_16 : f32 to vector<1x128xf32>
    %32 = arith.mulf %31, %4 : vector<1x128xf32>
    %33 = arith.addf %30, %32 : vector<1x128xf32>
    %c0_17 = arith.constant 0 : index
    %c0_18 = arith.constant 0 : index
    %34 = vector.load %arg5[%c0_17, %c0_18] : memref<2x128xf32, #tpu.memory_space<vmem>>, vector<1x128xf32>
    tpu.vector_store %arg5[%c0_17, %c0_18], %33 {strides = array<i32>} : memref<2x128xf32, #tpu.memory_space<vmem>>, vector<1x128xf32>,
    %cst_19 = arith.constant 0.899999976 : f32
    %35 = vector.broadcast %cst_19 : f32 to vector<1x128xf32>
    %36 = arith.mulf %35, %28 : vector<1x128xf32>
    %cst_20 = arith.constant 1.000000e-01 : f32
    %37 = vector.broadcast %cst_20 : f32 to vector<1x128xf32>
    %38 = arith.mulf %37, %13 : vector<1x128xf32>
    %39 = arith.addf %36, %38 : vector<1x128xf32>
    %c1_21 = arith.constant 1 : index
    %c0_22 = arith.constant 0 : index
    %40 = vector.load %arg5[%c1_21, %c0_22] : memref<2x128xf32, #tpu.memory_space<vmem>>, vector<1x128xf32>
    tpu.vector_store %arg5[%c1_21, %c0_22], %39 {strides = array<i32>} : memref<2x128xf32, #tpu.memory_space<vmem>>, vector<1x128xf32>,
    return
  }
  func.func @transform_0(%arg0: i32) -> (i32, i32) {
    %c0_i32 = arith.constant 0 : i32
    %c0_i32_0 = arith.constant 0 : i32
    return %c0_i32, %arg0 : i32, i32
  }
  func.func @transform_1(%arg0: i32) -> (i32, i32) {
    %c0_i32 = arith.constant 0 : i32
    %c0_i32_0 = arith.constant 0 : i32
    return %c0_i32, %arg0 : i32, i32
  }
  func.func @transform_2(%arg0: i32) -> (i32, i32) {
    %c0_i32 = arith.constant 0 : i32
    %c0_i32_0 = arith.constant 0 : i32
    return %c0_i32, %arg0 : i32, i32
  }
  func.func @transform_3(%arg0: i32) -> (i32, i32) {
    %c0_i32 = arith.constant 0 : i32
    %c0_i32_0 = arith.constant 0 : i32
    return %c0_i32, %arg0 : i32, i32
  }
  func.func @transform_4(%arg0: i32) -> (i32, i32) {
    %c0_i32 = arith.constant 0 : i32
    %c0_i32_0 = arith.constant 0 : i32
    return %c0_i32, %arg0 : i32, i32
  }
}

</mosaic_0001>

<llo_original>
// kernel: tpu_custom_call.1
$region0: #{tpu_custom_call.1}
  #allocation0 [shape = 'u32[]', space=smem, size = 0x4, offset = 0x4, fixed_abs, tag = 'smem constant byte address 0x4 - core index']
  #allocation1 [shape = 'u32[144,128]{1,0:T(1,128)}', space=vmem, size = 0x12000, scoped, tag = 'internal scratch']
  %s0 = inlined_call_operand.hbm [shape: f32[16,256], index: 0, kind: input, shape index: {}]
  %s1 = inlined_call_operand.hbm [shape: f32[2,256], index: 1, kind: input, shape index: {}]
  %s2 = inlined_call_operand.vmem [shape: f32[2,256], index: 2, kind: input, shape index: {}]
  %s3 = inlined_call_operand.hbm [shape: f32[16,256], index: 3, kind: output, shape index: {0}]
  %s4 = inlined_call_operand.hbm [shape: f32[2,256], index: 4, kind: output, shape index: {1}]
  %5 = xla_tuple %s3, %s4
  %s6 = sld [smem:[#allocation0]]
  $region61: #{tpu_custom_call.1} parent=0
    _
  %s8 = ssub.s32 1, %s6
  %s9 = scalar_select 0, %s8, %s6
  $region1: #{tpu_custom_call.1} parent=0
    #allocation2 [shape = 'u8[16384]{0}', space=vmem, size = 0x4000, scoped, tag = 'input window, operand 0']
    #allocation3 [shape = 's32[2]{0}', space=sflag, size = 0x8, scoped, tag = 'scoped memory for tpu_custom_call.1']
    #allocation4 [shape = 's32[2]{0}', space=sflag, size = 0x8, scoped, tag = 'scoped memory for tpu_custom_call.1']
    #allocation5 [shape = 'u8[2048]{0}', space=vmem, size = 0x800, scoped, tag = 'input window, operand 1']
    #allocation6 [shape = 's32[2]{0}', space=sflag, size = 0x8, scoped, tag = 'scoped memory for tpu_custom_call.1']
    #allocation7 [shape = 'u8[16384]{0}', space=vmem, size = 0x4000, scoped, tag = 'output window, operand 0']
    #allocation8 [shape = 'u8[2048]{0}', space=vmem, size = 0x800, scoped, tag = 'output window, operand 1']
    #allocation9 [shape = 's32[2]{0}', space=sflag, size = 0x8, scoped, tag = 'scoped memory for tpu_custom_call.1']
    %10 = vsyncpa [#allocation3], 0
    %s11 = scalar_lea.sflag [#allocation3], 1
    %12 = vsyncpa %s11, 0
    %13 = vsyncpa [#allocation6], 0
    %s14 = scalar_lea.sflag [#allocation6], 1
    %15 = vsyncpa %s14, 0
    %16 = vsyncpa [#allocation4], 0
    %s17 = scalar_lea.sflag [#allocation4], 1
    %18 = vsyncpa %s17, 0
    %19 = vsyncpa [#allocation9], 0
    %s20 = scalar_lea.sflag [#allocation9], 1
    %21 = vsyncpa %s20, 0
    loop: start=0, step=1, limit=4
    $region2: #{tpu_custom_call.1} parent=1 // loop_pre_header
      _
    $region3: #{tpu_custom_call.1} parent=1 // loop_header
      %s23 = sphi 0, %s27
      %p24 = scmp.ge.s32.totalorder %s23, 4
      %s33 = sphi 0, %s35
      %s36 = sphi 0, %s33
      %s37 = sphi 0, %s36
      %s53 = sphi 0, %s37
      %s59 = sphi 0, %s61
      %s62 = sphi 0, %s59
      %s63 = sphi 0, %s62
      %s79 = sphi 0, %s63
      %s85 = sphi 0, %s87
      %s88 = sphi 0, %s85
      %s89 = sphi 0, %s88
      %s105 = sphi 0, %s89
      %s111 = sphi 0, %s113
      %s114 = sphi 0, %s111
      %s115 = sphi 0, %s114
      %s131 = sphi 0, %s115
      %s137 = sphi 0, %s139
      %s140 = sphi 0, %s137
      %s141 = sphi 0, %s140
      %s157 = sphi 0, %s141
    $region4: #{tpu_custom_call.1} parent=1 // loop_header_branch
      %26 = sbr.rel (%p24) target = $region8
    $region5: #{tpu_custom_call.1} parent=1 // loop_body
      %s28 = ssub.s32 %s23, 1
      %s29 = ssub.s32 %s23, 2
      %s30 = sadd.s32 %s23, 1
      %s31 = ssub.s32 %s23, %s30
      %p32 = scmp.eq.s32.totalorder %s31, 0
      %s34 = sadd.s32 %s33, 1
      %s35 = scalar_select %p32, %s33, %s34
      %p38 = pneg %p32
      %p39 = scmp.eq.s32.totalorder %s23, 1
      %p40 = por %p38, %p39
      %p41 = scmp.ne.s32.totalorder %s33, %s36
      %p42 = scmp.eq.s32.totalorder %s23, 0
      %p43 = por %p41, %p42
      %p44 = scmp.ne.s32.totalorder %s33, %s36
      %p45 = scmp.eq.s32.totalorder %s28, 1
      %p46 = por %p44, %p45
      %p47 = scmp.ne.s32.totalorder %s36, %s37
      %p48 = scmp.eq.s32.totalorder %s28, 0
      %p49 = por %p47, %p48
      %p50 = scmp.ne.s32.totalorder %s36, %s37
      %p51 = scmp.eq.s32.totalorder %s29, 1
      %p52 = por %p50, %p51
      %p54 = scmp.ne.s32.totalorder %s37, %s53
      %p55 = scmp.eq.s32.totalorder %s29, 0
      %p56 = por %p54, %p55
      %s57 = ssub.s32 %s23, %s30
      %p58 = scmp.eq.s32.totalorder %s57, 0
      %s60 = sadd.s32 %s59, 1
      %s61 = scalar_select %p58, %s59, %s60
      %p64 = pneg %p58
      %p65 = scmp.eq.s32.totalorder %s23, 1
      %p66 = por %p64, %p65
      %p67 = scmp.ne.s32.totalorder %s59, %s62
      %p68 = scmp.eq.s32.totalorder %s23, 0
      %p69 = por %p67, %p68
      %p70 = scmp.ne.s32.totalorder %s59, %s62
      %p71 = scmp.eq.s32.totalorder %s28, 1
      %p72 = por %p70, %p71
      %p73 = scmp.ne.s32.totalorder %s62, %s63
      %p74 = scmp.eq.s32.totalorder %s28, 0
      %p75 = por %p73, %p74
      %p76 = scmp.ne.s32.totalorder %s62, %s63
      %p77 = scmp.eq.s32.totalorder %s29, 1
      %p78 = por %p76, %p77
      %p80 = scmp.ne.s32.totalorder %s63, %s79
      %p81 = scmp.eq.s32.totalorder %s29, 0
      %p82 = por %p80, %p81
      %s83 = ssub.s32 %s23, %s30
      %p84 = scmp.eq.s32.totalorder %s83, 0
      %s86 = sadd.s32 %s85, 1
      %s87 = scalar_select %p84, %s85, %s86
      %p90 = pneg %p84
      %p91 = scmp.eq.s32.totalorder %s23, 1
      %p92 = por %p90, %p91
      %p93 = scmp.ne.s32.totalorder %s85, %s88
      %p94 = scmp.eq.s32.totalorder %s23, 0
      %p95 = por %p93, %p94
      %p96 = scmp.ne.s32.totalorder %s85, %s88
      %p97 = scmp.eq.s32.totalorder %s28, 1
      %p98 = por %p96, %p97
      %p99 = scmp.ne.s32.totalorder %s88, %s89
      %p100 = scmp.eq.s32.totalorder %s28, 0
      %p101 = por %p99, %p100
      %p102 = scmp.ne.s32.totalorder %s88, %s89
      %p103 = scmp.eq.s32.totalorder %s29, 1
      %p104 = por %p102, %p103
      %p106 = scmp.ne.s32.totalorder %s89, %s105
      %p107 = scmp.eq.s32.totalorder %s29, 0
      %p108 = por %p106, %p107
      %s109 = ssub.s32 %s23, %s30
      %p110 = scmp.eq.s32.totalorder %s109, 0
      %s112 = sadd.s32 %s111, 1
      %s113 = scalar_select %p110, %s111, %s112
      %p116 = pneg %p110
      %p117 = scmp.eq.s32.totalorder %s23, 1
      %p118 = por %p116, %p117
      %p119 = scmp.ne.s32.totalorder %s111, %s114
      %p120 = scmp.eq.s32.totalorder %s23, 0
      %p121 = por %p119, %p120
      %p122 = scmp.ne.s32.totalorder %s111, %s114
      %p123 = scmp.eq.s32.totalorder %s28, 1
      %p124 = por %p122, %p123
      %p125 = scmp.ne.s32.totalorder %s114, %s115
      %p126 = scmp.eq.s32.totalorder %s28, 0
      %p127 = por %p125, %p126
      %p128 = scmp.ne.s32.totalorder %s114, %s115
      %p129 = scmp.eq.s32.totalorder %s29, 1
      %p130 = por %p128, %p129
      %p132 = scmp.ne.s32.totalorder %s115, %s131
      %p133 = scmp.eq.s32.totalorder %s29, 0
      %p134 = por %p132, %p133
      %s135 = ssub.s32 %s23, %s30
      %p136 = scmp.eq.s32.totalorder %s135, 0
      %s138 = sadd.s32 %s137, 1
      %s139 = scalar_select %p136, %s137, %s138
      %p142 = pneg %p136
      %p143 = scmp.eq.s32.totalorder %s23, 1
      %p144 = por %p142, %p143
      %p145 = scmp.ne.s32.totalorder %s137, %s140
      %p146 = scmp.eq.s32.totalorder %s23, 0
      %p147 = por %p145, %p146
      %p148 = scmp.ne.s32.totalorder %s137, %s140
      %p149 = scmp.eq.s32.totalorder %s28, 1
      %p150 = por %p148, %p149
      %p151 = scmp.ne.s32.totalorder %s140, %s141
      %p152 = scmp.eq.s32.totalorder %s28, 0
      %p153 = por %p151, %p152
      %p154 = scmp.ne.s32.totalorder %s140, %s141
      %p155 = scmp.eq.s32.totalorder %s29, 1
      %p156 = por %p154, %p155
      %p158 = scmp.ne.s32.totalorder %s141, %s157
      %p159 = scmp.eq.s32.totalorder %s29, 0
      %p160 = por %p158, %p159
      %p161 = scmp.le.s32.totalorder 1, %s23
      %p162 = scmp.lt.s32.totalorder %s23, 3
      %p163 = pnand %p161, %p162
      %p164 = pneg %p163
      // Predicated region
      $region9: #{tpu_custom_call.1} parent=5 // pred_check
        _
      $region10: #{tpu_custom_call.1} parent=5 // pred_check_branch
        %166 = sbr.rel (%p163) target = $region12
      $region11: #{tpu_custom_call.1} parent=5 // pred_region
        %s167 = ssub.s32 %s23, 1
      $region12: #{tpu_custom_call.1} parent=5 // pred_fallthru
        _
      %p168 = scmp.lt.s32.totalorder %s23, 2
      // Predicated region
      $region13: #{tpu_custom_call.1} parent=5 // pred_check
        %p169 = pneg %p168
      $region14: #{tpu_custom_call.1} parent=5 // pred_check_branch
        %171 = sbr.rel (%p169) target = $region16
      $region15: #{tpu_custom_call.1} parent=5 // pred_region
        // Predicated region
        $region17: #{tpu_custom_call.1} parent=15 // pred_check
          %p172 = pneg %p43
        $region18: #{tpu_custom_call.1} parent=15 // pred_check_branch
          %174 = sbr.rel (%p172) target = $region20
        $region19: #{tpu_custom_call.1} parent=15 // pred_region
          %s175 = sand.u32 %s33, 1
          %s176 = scalar_lea.sflag [#allocation3], %s175
          %s177 = sand.u32 %s33, 1
          %s178 = smul.addr %s177, 16
          %s179 = scalar_lea.vmem [#allocation2], %s178
          %s181 = ssub.s32 256, 256
          %182 = vsyncadd %s176, %s181
          %s183 = smul.addr %s23, 128
          %s184 = scalar_lea.hbm %s0, %s183
          %s185 = sshll.u32 %s179, 4
          %s186 = int_to_ptr.vmem [resolvable:$true] %s185
          %191 = dma.hbm_to_vmem [thread:$0]  %s184, 256, %s186, %s176, 256, 128, 8
        $region20: #{tpu_custom_call.1} parent=15 // pred_fallthru
          _
        // Predicated region
        $region21: #{tpu_custom_call.1} parent=15 // pred_check
          %p192 = pneg %p69
        $region22: #{tpu_custom_call.1} parent=15 // pred_check_branch
          %194 = sbr.rel (%p192) target = $region24
        $region23: #{tpu_custom_call.1} parent=15 // pred_region
          %s195 = sand.u32 %s59, 1
          %s196 = scalar_lea.sflag [#allocation6], %s195
          %s197 = sand.u32 %s59, 1
          %s198 = smul.addr %s197, 2
          %s199 = scalar_lea.vmem [#allocation5], %s198
          %s201 = ssub.s32 32, 32
          %202 = vsyncadd %s196, %s201
          %s203 = smul.addr %s23, 32
          %s204 = scalar_lea.hbm %s1, %s203
          %s206 = sshll.u32 %s199, 4
          %s207 = int_to_ptr.vmem [resolvable:$true] %s206
          %209 = dma.hbm_to_vmem [thread:$0]  %s204, 32, %s207, %s196
        $region24: #{tpu_custom_call.1} parent=15 // pred_fallthru
          _
        // Predicated region
        $region25: #{tpu_custom_call.1} parent=15 // pred_check
          %p210 = pneg %p95
        $region26: #{tpu_custom_call.1} parent=15 // pred_check_branch
          %212 = sbr.rel (%p210) target = $region28
        $region27: #{tpu_custom_call.1} parent=15 // pred_region
          %p213 = scmp.lt.s32.totalorder %s23, 1
          %s214 = scalar_select %p213, %s23, 1
          %s215 = smul.addr %s214, 2
          %s216 = scalar_lea.vmem %s2, %s215
        $region28: #{tpu_custom_call.1} parent=15 // pred_fallthru
          _
      $region16: #{tpu_custom_call.1} parent=5 // pred_fallthru
        _
      %p217 = scmp.le.s32.totalorder 1, %s23
      %p218 = scmp.lt.s32.totalorder %s23, 3
      %p219 = pnand %p217, %p218
      %p220 = pneg %p219
      // Predicated region
      $region29: #{tpu_custom_call.1} parent=5 // pred_check
        _
      $region30: #{tpu_custom_call.1} parent=5 // pred_check_branch
        %222 = sbr.rel (%p219) target = $region32
      $region31: #{tpu_custom_call.1} parent=5 // pred_region
        %s223 = ssub.s32 %s23, 1
        %s224 = sand.u32 %s36, 1
        %s225 = scalar_lea.sflag [#allocation3], %s224
        %s226 = sand.u32 %s36, 1
        %s227 = smul.addr %s226, 16
        %s228 = scalar_lea.vmem [#allocation2], %s227
        // Predicated region
        $region33: #{tpu_custom_call.1} parent=31 // pred_check
          %p229 = pneg %p49
        $region34: #{tpu_custom_call.1} parent=31 // pred_check_branch
          %231 = sbr.rel (%p229) target = $region36
        $region35: #{tpu_custom_call.1} parent=31 // pred_region
          %232 = dma.done %s225, 256
        $region36: #{tpu_custom_call.1} parent=31 // pred_fallthru
          _
        %s233 = sand.u32 %s62, 1
        %s234 = scalar_lea.sflag [#allocation6], %s233
        %s235 = sand.u32 %s62, 1
        %s236 = smul.addr %s235, 2
        %s237 = scalar_lea.vmem [#allocation5], %s236
        // Predicated region
        $region37: #{tpu_custom_call.1} parent=31 // pred_check
          %p238 = pneg %p75
        $region38: #{tpu_custom_call.1} parent=31 // pred_check_branch
          %240 = sbr.rel (%p238) target = $region40
        $region39: #{tpu_custom_call.1} parent=31 // pred_region
          %241 = dma.done %s234, 32
        $region40: #{tpu_custom_call.1} parent=31 // pred_fallthru
          _
        %s242 = sand.u32 %s36, 1
        %s243 = scalar_lea.sflag [#allocation3], %s242
        %s244 = sand.u32 %s36, 1
        %s245 = smul.addr %s244, 16
        %s246 = scalar_lea.vmem [#allocation2], %s245
        %p247 = pneg %p49
        %p248 = pneg %p46
        %s249 = sand.u32 %s62, 1
        %s250 = scalar_lea.sflag [#allocation6], %s249
        %s251 = sand.u32 %s62, 1
        %s252 = smul.addr %s251, 2
        %s253 = scalar_lea.vmem [#allocation5], %s252
        %p254 = pneg %p75
        %p255 = pneg %p72
        %p256 = scmp.lt.s32.totalorder %s28, 1
        %s257 = scalar_select %p256, %s28, 1
        %s258 = smul.addr %s257, 2
        %s259 = scalar_lea.vmem %s2, %s258
        %p260 = pneg %p101
        %p261 = pneg %p98
        %p262 = pneg %p127
        %p263 = pneg %p124
        %s264 = sand.u32 %s114, 1
        %s265 = scalar_lea.sflag [#allocation4], %s264
        %s266 = sand.u32 %s114, 1
        %s267 = smul.addr %s266, 16
        %s268 = scalar_lea.vmem [#allocation7], %s267
        %p269 = pneg %p153
        %p270 = pneg %p150
        %s271 = sand.u32 %s140, 1
        %s272 = scalar_lea.sflag [#allocation9], %s271
        %s273 = sand.u32 %s140, 1
        %s274 = smul.addr %s273, 2
        %s275 = scalar_lea.vmem [#allocation8], %s274
        %p276 = scmp.lt.s32.totalorder %s28, 1
        %s277 = scalar_select %p276, %s28, 1
        %s278 = smul.addr %s277, 2
        %s279 = scalar_lea.vmem %s2, %s278
        %v280 = vld [vmem:[%s228] sm:$0xff]
        %v281 = vld [vmem:[%s228 + $0x8] sm:$0xff]
        %v282 = vadd.f32 %v280, %v281
        %v283 = vrot.slane %v282, 4
        %v284 = vadd.f32 %v282, %v283
        %v285 = vrot.slane %v284, 2
        %v286 = vadd.f32 %v284, %v285
        %v287 = vrot.slane %v286, 1
        %v288 = vadd.f32 %v286, %v287
        %v289 = vrcp.pop 16.0
        %v290 = vmul.f32 %v288, %v289
        %v291 = vmul.f32 %v280, %v280
        %v292 = vmul.f32 %v281, %v281
        %v293 = vadd.f32 %v291, %v292
        %v294 = vrot.slane %v293, 4
        %v295 = vadd.f32 %v293, %v294
        %v296 = vrot.slane %v295, 2
        %v297 = vadd.f32 %v295, %v296
        %v298 = vrot.slane %v297, 1
        %v299 = vadd.f32 %v297, %v298
        %v300 = vmul.f32 %v299, %v289
        %v301 = vmul.f32 %v290, %v290
        %v302 = vsub.f32 %v300, %v301
        %v303 = vmax.f32 %v302, 0.0
        %v304 = vld [vmem:[%s237] sm:$0x1]
        %v305 = vld [vmem:[%s237 + $0x1] sm:$0x1]
        %v306 = vadd.f32 %v303, 1e-05
        %v307 = vrsqrt.pop %v306
        %v308 = vmul.f32 %v304, %v307
        %v309 = vmul.f32 %v290, %v308
        %v310 = vsub.f32 %v305, %v309
        %v311 = vlaneseq
        %v312 = vshrl.u32 %v311, 7
        %v313 = vsub.s32 0, %v312
        %v314 = vrot.slane %v308, %v313
        %v315 = vmul.f32 %v280, %v314
        %v316 = vmul.f32 %v281, %v314
        %v317 = vlaneseq
        %v318 = vshrl.u32 %v317, 7
        %v319 = vsub.s32 0, %v318
        %v320 = vrot.slane %v310, %v319
        %v321 = vadd.f32 %v315, %v320
        %v322 = vadd.f32 %v316, %v320
        %323 = vst [vmem:[%s268] sm:$0xff] %v321
        %324 = vst [vmem:[%s268 + $0x8] sm:$0xff] %v322
        %v325 = vld [vmem:[%s279] sm:$0x1]
        %v326 = vld [vmem:[%s279 + $0x1] sm:$0x1]
        %v327 = vmul.f32 %v325, 0.9
        %v328 = vmul.f32 %v290, 0.1
        %v329 = vadd.f32 %v327, %v328
        %330 = vst [vmem:[%s275] sm:$0x1] %v329
        %v331 = vmul.f32 %v326, 0.9
        %v332 = vmul.f32 %v303, 0.1
        %v333 = vadd.f32 %v331, %v332
        %334 = vst [vmem:[%s275 + $0x1] sm:$0x1] %v333
        %s335 = sand.u32 %s114, 1
        %s336 = scalar_lea.sflag [#allocation4], %s335
        %s337 = sand.u32 %s114, 1
        %s338 = smul.addr %s337, 16
        %s339 = scalar_lea.vmem [#allocation7], %s338
        %s340 = sand.u32 %s140, 1
        %s341 = scalar_lea.sflag [#allocation9], %s340
        %s342 = sand.u32 %s140, 1
        %s343 = smul.addr %s342, 2
        %s344 = scalar_lea.vmem [#allocation8], %s343
        // Predicated region
        $region41: #{tpu_custom_call.1} parent=31 // pred_check
          %p345 = pneg %p124
        $region42: #{tpu_custom_call.1} parent=31 // pred_check_branch
          %347 = sbr.rel (%p345) target = $region44
        $region43: #{tpu_custom_call.1} parent=31 // pred_region
          %s349 = ssub.s32 256, 256
          %350 = vsyncadd %s336, %s349
          %s351 = smul.addr %s28, 128
          %s352 = scalar_lea.hbm %s3, %s351
          %s353 = sshll.u32 %s339, 4
          %s354 = int_to_ptr.vmem [resolvable:$true] %s353
          %359 = dma.vmem_to_hbm [thread:$0]  %s354, 256, %s352, %s336, 128, 256, 8
        $region44: #{tpu_custom_call.1} parent=31 // pred_fallthru
          _
        // Predicated region
        $region45: #{tpu_custom_call.1} parent=31 // pred_check
          %p360 = pneg %p150
        $region46: #{tpu_custom_call.1} parent=31 // pred_check_branch
          %362 = sbr.rel (%p360) target = $region48
        $region47: #{tpu_custom_call.1} parent=31 // pred_region
          %s364 = ssub.s32 32, 32
          %365 = vsyncadd %s341, %s364
          %s366 = smul.addr %s28, 32
          %s367 = scalar_lea.hbm %s4, %s366
          %s369 = sshll.u32 %s344, 4
          %s370 = int_to_ptr.vmem [resolvable:$true] %s369
          %372 = dma.vmem_to_hbm [thread:$0]  %s370, 32, %s367, %s341
        $region48: #{tpu_custom_call.1} parent=31 // pred_fallthru
          _
      $region32: #{tpu_custom_call.1} parent=5 // pred_fallthru
        _
      %p373 = scmp.le.s32.totalorder 2, %s23
      // Predicated region
      $region49: #{tpu_custom_call.1} parent=5 // pred_check
        %p374 = pneg %p373
      $region50: #{tpu_custom_call.1} parent=5 // pred_check_branch
        %376 = sbr.rel (%p374) target = $region52
      $region51: #{tpu_custom_call.1} parent=5 // pred_region
        %s377 = ssub.s32 %s23, 2
        // Predicated region
        $region53: #{tpu_custom_call.1} parent=51 // pred_check
          %p378 = pneg %p130
        $region54: #{tpu_custom_call.1} parent=51 // pred_check_branch
          %380 = sbr.rel (%p378) target = $region56
        $region55: #{tpu_custom_call.1} parent=51 // pred_region
          %s381 = sand.u32 %s115, 1
          %s382 = scalar_lea.sflag [#allocation4], %s381
          %s383 = sand.u32 %s115, 1
          %s384 = smul.addr %s383, 16
          %s385 = scalar_lea.vmem [#allocation7], %s384
          %386 = dma.done %s382, 256
        $region56: #{tpu_custom_call.1} parent=51 // pred_fallthru
          _
        // Predicated region
        $region57: #{tpu_custom_call.1} parent=51 // pred_check
          %p387 = pneg %p156
        $region58: #{tpu_custom_call.1} parent=51 // pred_check_branch
          %389 = sbr.rel (%p387) target = $region60
        $region59: #{tpu_custom_call.1} parent=51 // pred_region
          %s390 = sand.u32 %s141, 1
          %s391 = scalar_lea.sflag [#allocation9], %s390
          %s392 = sand.u32 %s141, 1
          %s393 = smul.addr %s392, 2
          %s394 = scalar_lea.vmem [#allocation8], %s393
          %395 = dma.done %s391, 32
        $region60: #{tpu_custom_call.1} parent=51 // pred_fallthru
          _
      $region52: #{tpu_custom_call.1} parent=5 // pred_fallthru
        _
    $region6: #{tpu_custom_call.1} parent=1 // loop_footer
      %s27 = sadd.s32 1, %s23
    $region7: #{tpu_custom_call.1} parent=1 // loop_footer_branch
      %22 = sbr.rel target = $region3
    $region8: #{tpu_custom_call.1} parent=1 // loop_exit
      _
    %396 = vsyncpa [#allocation3], 1
    %s397 = scalar_lea.sflag [#allocation3], 1
    %398 = vsyncpa %s397, 1
    %399 = vsyncpa [#allocation6], 1
    %s400 = scalar_lea.sflag [#allocation6], 1
    %401 = vsyncpa %s400, 1
    %402 = vsyncpa [#allocation4], 1
    %s403 = scalar_lea.sflag [#allocation4], 1
    %404 = vsyncpa %s403, 1
    %405 = vsyncpa [#allocation9], 1
    %s406 = scalar_lea.sflag [#allocation9], 1
    %407 = vsyncpa %s406, 1

</llo_original>
